<compile_context>
chip_gen: v7x
topology: tpu7x:2x2x1
jax: 0.10.0
libtpu: 0.0.40
codegen_flags: <defaults>
</compile_context>

<pallas_src>
import jax
import jax.numpy as jnp
from jax.experimental import pallas as pl
from jax.experimental.pallas import tpu as pltpu

EPS = 1e-5
_LANE = 128
_TARGET_TILE_BYTES = 4 << 20      # ~4 MiB of x per grid step
_MEGACORE_MIN_BYTES = 1 << 20     # split a single-step grid only if >= ~1 MiB of work
_VMEM_LIMIT_BYTES = 32 << 20      # fits v7x 64 MiB physical; overrides v5e 16 MiB default


def _withbias_ln_kernel(x_ref, w_ref, b_ref, o_ref):
    # x_ref/o_ref: (b_blk, C, tn) -- C on sublanes, spatial on lanes.
    # w_ref/b_ref: (C, 1)         -- broadcast across lanes and batch.
    x = x_ref[...].astype(jnp.float32)
    inv_c = jnp.float32(1.0 / x.shape[1])
    s1 = jnp.sum(x, axis=1, keepdims=True)
    s2 = jnp.sum(x * x, axis=1, keepdims=True)
    mu = s1 * inv_c
    var = jnp.maximum(s2 * inv_c - mu * mu, 0.0)    # unbiased=False; clamp f32 cancellation
    r = jax.lax.rsqrt(var + EPS)
    w = w_ref[...].astype(jnp.float32)
    b = b_ref[...].astype(jnp.float32)
    o_ref[...] = ((x - mu) * r * w + b).astype(o_ref.dtype)


def _biasfree_ln_kernel(x_ref, w_ref, o_ref):
    # x_ref/o_ref: (b_blk, C, tn); w_ref: (C, 1)
    x = x_ref[...].astype(jnp.float32)
    inv_c = jnp.float32(1.0 / x.shape[1])
    s1 = jnp.sum(x, axis=1, keepdims=True)
    s2 = jnp.sum(x * x, axis=1, keepdims=True)
    mu = s1 * inv_c
    var = jnp.maximum(s2 * inv_c - mu * mu, 0.0)    # variance around the mean
    r = jax.lax.rsqrt(var + EPS)
    w = w_ref[...].astype(jnp.float32)
    # BiasFree (Restormer): mean is used for the variance but NOT subtracted.
    o_ref[...] = (x * r * w).astype(o_ref.dtype)


def _largest_divisor_leq(n, k):
    k = max(1, min(n, k))
    for d in range(k, 0, -1):
        if n % d == 0:
            return d
    return 1


def _choose_tiling(B, C, HW, itemsize, target_tile_bytes):
    """Pick (b_blk, n_batch, tn, n_spatial) for block_shape=(b_blk, C, tn)."""
    row_bytes = C * itemsize  # bytes of one lane column
    max_tn = max(_LANE, (target_tile_bytes // row_bytes) // _LANE * _LANE)

    if HW <= max_tn:
        # Full spatial extent in one lane tile (legal even if HW % 128 != 0);
        # recover per-step volume by batching over B (leading dim, unconstrained).
        tn = HW
        b_blk = _largest_divisor_leq(B, max(1, target_tile_bytes // max(row_bytes * HW, 1)))
    else:
        tn = max_tn            # multiple of 128 -> lane-dense, unmasked vst
        b_blk = 1
    n_spatial = pl.cdiv(HW, tn)
    n_batch = B // b_blk       # b_blk divides B exactly

    # v7x megacore: guarantee >= 2 grid steps when there is enough work to split.
    if n_batch * n_spatial == 1 and b_blk * row_bytes * HW >= _MEGACORE_MIN_BYTES:
        if B >= 2:
            b_blk = _largest_divisor_leq(B, B // 2)
            n_batch = B // b_blk
        elif HW >= 2 * _LANE:
            tn = pl.cdiv(pl.cdiv(HW, 2), _LANE) * _LANE
            n_spatial = pl.cdiv(HW, tn)
    return b_blk, n_batch, tn, n_spatial


def layernorm_nchw(x, weight, bias=None, layernorm_type="WithBias", *,
                   target_tile_bytes=_TARGET_TILE_BYTES):
    """x: (B, C, H, W).  Returns (B, C, H, W), matching LayerNorm.forward."""
    B, C, H, W = x.shape
    HW = H * W
    if layernorm_type != "BiasFree" and bias is None:
        raise ValueError("WithBias LayerNorm requires a bias parameter.")

    x3 = x.reshape(B, C, HW)  # contiguous view: no data movement
    itemsize = jnp.dtype(x.dtype).itemsize
    b_blk, n_batch, tn, n_spatial = _choose_tiling(B, C, HW, itemsize, target_tile_bytes)
    grid = (n_batch, n_spatial)

    # No padding / no output slice: the last spatial block may be partial; OOB
    # lanes hold garbage that only affects their own (masked-on-store) columns.
    x_spec = pl.BlockSpec((b_blk, C, tn), lambda i, j: (i, 0, j))
    p_spec = pl.BlockSpec((C, 1), lambda i, j: (0, 0))  # params stay resident, not re-DMA'd
    out_shape = jax.ShapeDtypeStruct((B, C, HW), x.dtype)
    cp = pltpu.CompilerParams(
        dimension_semantics=("parallel", "parallel"),
        vmem_limit_bytes=_VMEM_LIMIT_BYTES,
    )

    w2 = weight.reshape(C, 1)
    if layernorm_type == "BiasFree":
        y3 = pl.pallas_call(
            _biasfree_ln_kernel,
            out_shape=out_shape,
            grid_spec=pltpu.PrefetchScalarGridSpec(
                num_scalar_prefetch=0,
                grid=grid,
                in_specs=[x_spec, p_spec],
                out_specs=x_spec,
            ),
            compiler_params=cp,
        )(x3, w2)
    else:  # WithBias
        b2 = bias.reshape(C, 1)
        y3 = pl.pallas_call(
            _withbias_ln_kernel,
            out_shape=out_shape,
            grid_spec=pltpu.PrefetchScalarGridSpec(
                num_scalar_prefetch=0,
                grid=grid,
                in_specs=[x_spec, p_spec, p_spec],
                out_specs=x_spec,
            ),
            compiler_params=cp,
        )(x3, w2, b2)

    return y3.reshape(B, C, H, W)


def _reference_nchw(x, weight, bias, layernorm_type):
    xf = x.astype(jnp.float32)
    mu = jnp.mean(xf, axis=1, keepdims=True)
    var = jnp.mean((xf - mu) ** 2, axis=1, keepdims=True)
    w = weight.astype(jnp.float32).reshape(1, -1, 1, 1)
    if layernorm_type == "BiasFree":
        y = xf / jnp.sqrt(var + EPS) * w
    else:
        b = bias.astype(jnp.float32).reshape(1, -1, 1, 1)
        y = (xf - mu) / jnp.sqrt(var + EPS) * w + b
    return y.astype(x.dtype)


if __name__ == "__main__":
    key = jax.random.PRNGKey(0)
    ok = True

    # (shape, forced tile budget): an aligned batch-blocked case, an odd-spatial
    # full-extent-tile case, and a forced multi-tile case whose last spatial
    # block is ragged (exercises the new no-pad partial-block path).
    cases = (
        ((2, 32, 16, 16), None),
        ((1, 48, 7, 9), None),
        ((1, 32, 20, 20), 16 * 1024),
    )
    for (shape, tile_bytes) in cases:
        B, C, H, W = shape
        kx, kw, kb, key = jax.random.split(key, 4)
        x = jax.random.normal(kx, shape, dtype=jnp.float32) + 3.0
        weight = 1.0 + 0.1 * jax.random.normal(kw, (C,), dtype=jnp.float32)
        bias = 0.1 * jax.random.normal(kb, (C,), dtype=jnp.float32)

        for ln_type in ("WithBias", "BiasFree"):
            kwargs = {} if tile_bytes is None else {"target_tile_bytes": tile_bytes}
            out = layernorm_nchw(x, weight, bias, layernorm_type=ln_type, **kwargs)
            out = jax.block_until_ready(out)
            ref = _reference_nchw(x, weight, bias, ln_type)
            ok = ok and bool(jnp.allclose(out, ref, atol=1e-4, rtol=1e-4))

    if ok:
        print("KERNEL_OK")
    else:
        print("KERNEL_MISMATCH")
</pallas_src>

<mosaic_0001>
module attributes {stable_mosaic.version = 11 : i64} {
  func.func @_withbias_ln_kernel(%arg0: i32, %arg1: i32, %arg2: memref<2x32x256xf32, #tpu.memory_space<vmem>>, %arg3: memref<32x1xf32, #tpu.memory_space<vmem>>, %arg4: memref<32x1xf32, #tpu.memory_space<vmem>>, %arg5: memref<2x32x256xf32, #tpu.memory_space<vmem>>) attributes {dimension_semantics = [#tpu.dimension_semantics<parallel>, #tpu.dimension_semantics<parallel>], iteration_bounds = array<i64: 1, 1>, scalar_prefetch = 0 : i64, scratch_operands = 0 : i64, tpu.core_type = #tpu.core_type<tc>, window_params = [{transform_indices = @transform_0, window_bounds = array<i64: 2, 32, 256>}, {pipeline_mode = #tpu.pipeline_mode<synchronous>, transform_indices = @transform_1, window_bounds = array<i64: 32, 1>}, {pipeline_mode = #tpu.pipeline_mode<synchronous>, transform_indices = @transform_2, window_bounds = array<i64: 32, 1>}, {transform_indices = @transform_3, window_bounds = array<i64: 2, 32, 256>}]} {
    %c0 = arith.constant 0 : index
    %c0_0 = arith.constant 0 : index
    %c0_1 = arith.constant 0 : index
    %0 = vector.load %arg2[%c0, %c0_0, %c0_1] : memref<2x32x256xf32, #tpu.memory_space<vmem>>, vector<2x32x256xf32>
    %cst = arith.constant dense<0.000000e+00> : vector<2x256xf32>
    %1 = vector.multi_reduction <add>, %0, %cst [1] : vector<2x32x256xf32> to vector<2x256xf32>
    %2 = vector.shape_cast %1 : vector<2x256xf32> to vector<2x1x256xf32>
    %3 = arith.mulf %0, %0 : vector<2x32x256xf32>
    %cst_2 = arith.constant dense<0.000000e+00> : vector<2x256xf32>
    %4 = vector.multi_reduction <add>, %3, %cst_2 [1] : vector<2x32x256xf32> to vector<2x256xf32>
    %5 = vector.shape_cast %4 : vector<2x256xf32> to vector<2x1x256xf32>
    %cst_3 = arith.constant 3.125000e-02 : f32
    %6 = vector.broadcast %cst_3 : f32 to vector<2x1x256xf32>
    %7 = arith.mulf %2, %6 : vector<2x1x256xf32>
    %cst_4 = arith.constant 3.125000e-02 : f32
    %8 = vector.broadcast %cst_4 : f32 to vector<2x1x256xf32>
    %9 = arith.mulf %5, %8 : vector<2x1x256xf32>
    %10 = arith.mulf %7, %7 : vector<2x1x256xf32>
    %11 = arith.subf %9, %10 : vector<2x1x256xf32>
    %cst_5 = arith.constant 0.000000e+00 : f32
    %12 = vector.broadcast %cst_5 : f32 to vector<2x1x256xf32>
    %13 = arith.maximumf %11, %12 : vector<2x1x256xf32>
    %cst_6 = arith.constant 9.99999974E-6 : f32
    %14 = vector.broadcast %cst_6 : f32 to vector<2x1x256xf32>
    %15 = arith.addf %13, %14 : vector<2x1x256xf32>
    %16 = math.rsqrt %15 : vector<2x1x256xf32>
    %c0_7 = arith.constant 0 : index
    %c0_8 = arith.constant 0 : index
    %17 = vector.load %arg3[%c0_7, %c0_8] : memref<32x1xf32, #tpu.memory_space<vmem>>, vector<32x1xf32>
    %c0_9 = arith.constant 0 : index
    %c0_10 = arith.constant 0 : index
    %18 = vector.load %arg4[%c0_9, %c0_10] : memref<32x1xf32, #tpu.memory_space<vmem>>, vector<32x1xf32>
    %19 = vector.broadcast %7 : vector<2x1x256xf32> to vector<2x32x256xf32>
    %20 = arith.subf %0, %19 : vector<2x32x256xf32>
    %21 = vector.broadcast %16 : vector<2x1x256xf32> to vector<2x32x256xf32>
    %22 = arith.mulf %20, %21 : vector<2x32x256xf32>
    %23 = vector.shape_cast %17 : vector<32x1xf32> to vector<1x32x1xf32>
    %24 = vector.broadcast %23 : vector<1x32x1xf32> to vector<2x32x256xf32>
    %25 = arith.mulf %22, %24 : vector<2x32x256xf32>
    %26 = vector.shape_cast %18 : vector<32x1xf32> to vector<1x32x1xf32>
    %27 = vector.broadcast %26 : vector<1x32x1xf32> to vector<2x32x256xf32>
    %28 = arith.addf %25, %27 : vector<2x32x256xf32>
    %c0_11 = arith.constant 0 : index
    %c0_12 = arith.constant 0 : index
    %c0_13 = arith.constant 0 : index
    %29 = vector.load %arg5[%c0_11, %c0_12, %c0_13] : memref<2x32x256xf32, #tpu.memory_space<vmem>>, vector<2x32x256xf32>
    tpu.vector_store %arg5[%c0_11, %c0_12, %c0_13], %28 {strides = array<i32>} : memref<2x32x256xf32, #tpu.memory_space<vmem>>, vector<2x32x256xf32>,
    return
  }
  func.func @transform_0(%arg0: i32, %arg1: i32) -> (i32, i32, i32) {
    %c0_i32 = arith.constant 0 : i32
    %c0_i32_0 = arith.constant 0 : i32
    return %arg0, %c0_i32, %arg1 : i32, i32, i32
  }
  func.func @transform_1(%arg0: i32, %arg1: i32) -> (i32, i32) {
    %c0_i32 = arith.constant 0 : i32
    %c0_i32_0 = arith.constant 0 : i32
    %c0_i32_1 = arith.constant 0 : i32
    return %c0_i32, %c0_i32_0 : i32, i32
  }
  func.func @transform_2(%arg0: i32, %arg1: i32) -> (i32, i32) {
    %c0_i32 = arith.constant 0 : i32
    %c0_i32_0 = arith.constant 0 : i32
    %c0_i32_1 = arith.constant 0 : i32
    return %c0_i32, %c0_i32_0 : i32, i32
  }
  func.func @transform_3(%arg0: i32, %arg1: i32) -> (i32, i32, i32) {
    %c0_i32 = arith.constant 0 : i32
    %c0_i32_0 = arith.constant 0 : i32
    return %arg0, %c0_i32, %arg1 : i32, i32, i32
  }
}

</mosaic_0001>

<llo_original>
// kernel: tpu_custom_call.1
$region0: #{tpu_custom_call.1}
  #allocation0 [shape = 'u32[]', space=smem, size = 0x4, offset = 0x4, fixed_abs, tag = 'smem constant byte address 0x4 - core index']
  #allocation1 [shape = 'u32[144,128]{1,0:T(1,128)}', space=vmem, size = 0x12000, scoped, tag = 'internal scratch']
  %s0 = inlined_call_operand.hbm [shape: f32[2,32,256], index: 0, kind: input, shape index: {}]
  %s1 = inlined_call_operand.vmem [shape: f32[32,1], index: 1, kind: input, shape index: {}]
  %s2 = inlined_call_operand.vmem [shape: f32[32,1], index: 2, kind: input, shape index: {}]
  %s3 = inlined_call_operand.hbm [shape: f32[2,32,256], index: 3, kind: output, shape index: {}]
  %s4 = sld [smem:[#allocation0]]
  $region26: #{tpu_custom_call.1} parent=0
    _
  %s6 = ssub.s32 1, %s4
  %s7 = scalar_select 0, %s6, %s4
  $region1: #{tpu_custom_call.1} parent=0
    #allocation2 [shape = 'u8[65536]{0}', space=vmem, size = 0x10000, scoped, tag = 'input window, operand 0, single buffered']
    #allocation3 [shape = 's32[1]{0}', space=sflag, size = 0x4, scoped, tag = 'scoped memory for tpu_custom_call.1']
    #allocation4 [shape = 's32[1]{0}', space=sflag, size = 0x4, scoped, tag = 'scoped memory for tpu_custom_call.1']
    #allocation5 [shape = 'u8[65536]{0}', space=vmem, size = 0x10000, scoped, tag = 'output window, operand 0, single buffered']
    %8 = vsyncpa [#allocation3], 0
    %9 = vsyncpa [#allocation4], 0
    // Predicated region
    $region2: #{tpu_custom_call.1} parent=1 // pred_check
      _
    $region3: #{tpu_custom_call.1} parent=1 // pred_check_branch
      %11 = sbr.rel (0) target = $region5
    $region4: #{tpu_custom_call.1} parent=1 // pred_region
      %s13 = ssub.s32 2048, 2048
      %14 = vsyncadd [#allocation3], %s13
      %s15 = sshll.u32 [#allocation2], 4
      %s16 = int_to_ptr.vmem [resolvable:$true] %s15
      %21 = dma.hbm_to_vmem [thread:$0]  %s0, 2048, %s16, [#allocation3], 256, 256, 16
    $region5: #{tpu_custom_call.1} parent=1 // pred_fallthru
      _
    // Predicated region
    $region6: #{tpu_custom_call.1} parent=1 // pred_check
      _
    $region7: #{tpu_custom_call.1} parent=1 // pred_check_branch
      %23 = sbr.rel (0) target = $region9
    $region8: #{tpu_custom_call.1} parent=1 // pred_region
      _
    $region9: #{tpu_custom_call.1} parent=1 // pred_fallthru
      _
    // Predicated region
    $region10: #{tpu_custom_call.1} parent=1 // pred_check
      _
    $region11: #{tpu_custom_call.1} parent=1 // pred_check_branch
      %25 = sbr.rel (0) target = $region13
    $region12: #{tpu_custom_call.1} parent=1 // pred_region
      _
    $region13: #{tpu_custom_call.1} parent=1 // pred_fallthru
      _
    // Predicated region
    $region14: #{tpu_custom_call.1} parent=1 // pred_check
      _
    $region15: #{tpu_custom_call.1} parent=1 // pred_check_branch
      %27 = sbr.rel (0) target = $region17
    $region16: #{tpu_custom_call.1} parent=1 // pred_region
      %28 = dma.done [#allocation3], 2048
    $region17: #{tpu_custom_call.1} parent=1 // pred_fallthru
      _
    %v29 = vld [vmem:[#allocation2] sm:$0xff]
    %v30 = vld [vmem:[#allocation2 + $0x8] sm:$0xff]
    %v31 = vld [vmem:[#allocation2 + $0x10] sm:$0xff]
    %v32 = vld [vmem:[#allocation2 + $0x18] sm:$0xff]
    %v33 = vld [vmem:[#allocation2 + $0x20] sm:$0xff]
    %v34 = vld [vmem:[#allocation2 + $0x28] sm:$0xff]
    %v35 = vld [vmem:[#allocation2 + $0x30] sm:$0xff]
    %v36 = vld [vmem:[#allocation2 + $0x38] sm:$0xff]
    %v37 = vld [vmem:[#allocation2 + $0x40] sm:$0xff]
    %v38 = vld [vmem:[#allocation2 + $0x48] sm:$0xff]
    %v39 = vld [vmem:[#allocation2 + $0x50] sm:$0xff]
    %v40 = vld [vmem:[#allocation2 + $0x58] sm:$0xff]
    %v41 = vld [vmem:[#allocation2 + $0x60] sm:$0xff]
    %v42 = vld [vmem:[#allocation2 + $0x68] sm:$0xff]
    %v43 = vld [vmem:[#allocation2 + $0x70] sm:$0xff]
    %v44 = vld [vmem:[#allocation2 + $0x78] sm:$0xff]
    %v45 = vadd.f32 %v29, %v31
    %v46 = vadd.f32 %v45, %v33
    %v47 = vadd.f32 %v46, %v35
    %v48 = vrot.slane %v47, 4
    %v49 = vadd.f32 %v47, %v48
    %v50 = vrot.slane %v49, 2
    %v51 = vadd.f32 %v49, %v50
    %v52 = vrot.slane %v51, 1
    %v53 = vadd.f32 %v51, %v52
    %v54 = vadd.f32 %v30, %v32
    %v55 = vadd.f32 %v54, %v34
    %v56 = vadd.f32 %v55, %v36
    %v57 = vrot.slane %v56, 4
    %v58 = vadd.f32 %v56, %v57
    %v59 = vrot.slane %v58, 2
    %v60 = vadd.f32 %v58, %v59
    %v61 = vrot.slane %v60, 1
    %v62 = vadd.f32 %v60, %v61
    %v63 = vadd.f32 %v37, %v39
    %v64 = vadd.f32 %v63, %v41
    %v65 = vadd.f32 %v64, %v43
    %v66 = vrot.slane %v65, 4
    %v67 = vadd.f32 %v65, %v66
    %v68 = vrot.slane %v67, 2
    %v69 = vadd.f32 %v67, %v68
    %v70 = vrot.slane %v69, 1
    %v71 = vadd.f32 %v69, %v70
    %v72 = vadd.f32 %v38, %v40
    %v73 = vadd.f32 %v72, %v42
    %v74 = vadd.f32 %v73, %v44
    %v75 = vrot.slane %v74, 4
    %v76 = vadd.f32 %v74, %v75
    %v77 = vrot.slane %v76, 2
    %v78 = vadd.f32 %v76, %v77
    %v79 = vrot.slane %v78, 1
    %v80 = vadd.f32 %v78, %v79
    %v81 = vmul.f32 %v29, %v29
    %v82 = vmul.f32 %v30, %v30
    %v83 = vmul.f32 %v31, %v31
    %v84 = vmul.f32 %v32, %v32
    %v85 = vmul.f32 %v33, %v33
    %v86 = vmul.f32 %v34, %v34
    %v87 = vmul.f32 %v35, %v35
    %v88 = vmul.f32 %v36, %v36
    %v89 = vmul.f32 %v37, %v37
    %v90 = vmul.f32 %v38, %v38
    %v91 = vmul.f32 %v39, %v39
    %v92 = vmul.f32 %v40, %v40
    %v93 = vmul.f32 %v41, %v41
    %v94 = vmul.f32 %v42, %v42
    %v95 = vmul.f32 %v43, %v43
    %v96 = vmul.f32 %v44, %v44
    %v97 = vadd.f32 %v81, %v83
    %v98 = vadd.f32 %v97, %v85
    %v99 = vadd.f32 %v98, %v87
    %v100 = vrot.slane %v99, 4
    %v101 = vadd.f32 %v99, %v100
    %v102 = vrot.slane %v101, 2
    %v103 = vadd.f32 %v101, %v102
    %v104 = vrot.slane %v103, 1
    %v105 = vadd.f32 %v103, %v104
    %v106 = vadd.f32 %v82, %v84
    %v107 = vadd.f32 %v106, %v86
    %v108 = vadd.f32 %v107, %v88
    %v109 = vrot.slane %v108, 4
    %v110 = vadd.f32 %v108, %v109
    %v111 = vrot.slane %v110, 2
    %v112 = vadd.f32 %v110, %v111
    %v113 = vrot.slane %v112, 1
    %v114 = vadd.f32 %v112, %v113
    %v115 = vadd.f32 %v89, %v91
    %v116 = vadd.f32 %v115, %v93
    %v117 = vadd.f32 %v116, %v95
    %v118 = vrot.slane %v117, 4
    %v119 = vadd.f32 %v117, %v118
    %v120 = vrot.slane %v119, 2
    %v121 = vadd.f32 %v119, %v120
    %v122 = vrot.slane %v121, 1
    %v123 = vadd.f32 %v121, %v122
    %v124 = vadd.f32 %v90, %v92
    %v125 = vadd.f32 %v124, %v94
    %v126 = vadd.f32 %v125, %v96
    %v127 = vrot.slane %v126, 4
    %v128 = vadd.f32 %v126, %v127
    %v129 = vrot.slane %v128, 2
    %v130 = vadd.f32 %v128, %v129
    %v131 = vrot.slane %v130, 1
    %v132 = vadd.f32 %v130, %v131
    %v133 = vmul.f32 %v53, 0.03125
    %v134 = vmul.f32 %v62, 0.03125
    %v135 = vmul.f32 %v71, 0.03125
    %v136 = vmul.f32 %v80, 0.03125
    %v137 = vmul.f32 %v105, 0.03125
    %v138 = vmul.f32 %v114, 0.03125
    %v139 = vmul.f32 %v123, 0.03125
    %v140 = vmul.f32 %v132, 0.03125
    %v141 = vmul.f32 %v133, %v133
    %v142 = vmul.f32 %v134, %v134
    %v143 = vmul.f32 %v135, %v135
    %v144 = vmul.f32 %v136, %v136
    %v145 = vsub.f32 %v137, %v141
    %v146 = vsub.f32 %v138, %v142
    %v147 = vsub.f32 %v139, %v143
    %v148 = vsub.f32 %v140, %v144
    %v149 = vmax.f32 %v145, 0.0
    %v150 = vmax.f32 %v146, 0.0
    %v151 = vmax.f32 %v147, 0.0
    %v152 = vmax.f32 %v148, 0.0
    %v153 = vadd.f32 %v149, 1e-05
    %v154 = vadd.f32 %v150, 1e-05
    %v155 = vadd.f32 %v151, 1e-05
    %v156 = vadd.f32 %v152, 1e-05
    %v157 = vrsqrt.pop %v153
    %v158 = vrsqrt.pop %v154
    %v159 = vrsqrt.pop %v155
    %v160 = vrsqrt.pop %v156
    %v161 = vld [vmem:[%s1] sm:$0xff]
    %v162 = vld [vmem:[%s1 + $0x8] sm:$0xff]
    %v163 = vld [vmem:[%s1 + $0x10] sm:$0xff]
    %v164 = vld [vmem:[%s1 + $0x18] sm:$0xff]
    %v165 = vld [vmem:[%s2] sm:$0xff]
    %v166 = vld [vmem:[%s2 + $0x8] sm:$0xff]
    %v167 = vld [vmem:[%s2 + $0x10] sm:$0xff]
    %v168 = vld [vmem:[%s2 + $0x18] sm:$0xff]
    %v169 = vsub.f32 %v29, %v133
    %v170 = vsub.f32 %v30, %v134
    %v171 = vsub.f32 %v31, %v133
    %v172 = vsub.f32 %v32, %v134
    %v173 = vsub.f32 %v33, %v133
    %v174 = vsub.f32 %v34, %v134
    %v175 = vsub.f32 %v35, %v133
    %v176 = vsub.f32 %v36, %v134
    %v177 = vsub.f32 %v37, %v135
    %v178 = vsub.f32 %v38, %v136
    %v179 = vsub.f32 %v39, %v135
    %v180 = vsub.f32 %v40, %v136
    %v181 = vsub.f32 %v41, %v135
    %v182 = vsub.f32 %v42, %v136
    %v183 = vsub.f32 %v43, %v135
    %v184 = vsub.f32 %v44, %v136
    %v185 = vmul.f32 %v169, %v157
    %v186 = vmul.f32 %v170, %v158
    %v187 = vmul.f32 %v171, %v157
    %v188 = vmul.f32 %v172, %v158
    %v189 = vmul.f32 %v173, %v157
    %v190 = vmul.f32 %v174, %v158
    %v191 = vmul.f32 %v175, %v157
    %v192 = vmul.f32 %v176, %v158
    %v193 = vmul.f32 %v177, %v159
    %v194 = vmul.f32 %v178, %v160
    %v195 = vmul.f32 %v179, %v159
    %v196 = vmul.f32 %v180, %v160
    %v197 = vmul.f32 %v181, %v159
    %v198 = vmul.f32 %v182, %v160
    %v199 = vmul.f32 %v183, %v159
    %v200 = vmul.f32 %v184, %v160
    %202 = vset.pattern.permute.xlu0 0
    %203 = vperm.xlu0 %202, %v161
    %v204 = vpop.permute.xlu0 %203
    %207 = vset.pattern.permute.xlu0 0
    %208 = vperm.xlu0 %207, %v162
    %v209 = vpop.permute.xlu0 %208
    %212 = vset.pattern.permute.xlu0 0
    %213 = vperm.xlu0 %212, %v163
    %v214 = vpop.permute.xlu0 %213
    %217 = vset.pattern.permute.xlu0 0
    %218 = vperm.xlu0 %217, %v164
    %v219 = vpop.permute.xlu0 %218
    %v221 = vmul.f32 %v185, %v204
    %v222 = vmul.f32 %v186, %v204
    %v223 = vmul.f32 %v187, %v209
    %v224 = vmul.f32 %v188, %v209
    %v225 = vmul.f32 %v189, %v214
    %v226 = vmul.f32 %v190, %v214
    %v227 = vmul.f32 %v191, %v219
    %v228 = vmul.f32 %v192, %v219
    %v229 = vmul.f32 %v193, %v204
    %v230 = vmul.f32 %v194, %v204
    %v231 = vmul.f32 %v195, %v209
    %v232 = vmul.f32 %v196, %v209
    %v233 = vmul.f32 %v197, %v214
    %v234 = vmul.f32 %v198, %v214
    %v235 = vmul.f32 %v199, %v219
    %v236 = vmul.f32 %v200, %v219
    %238 = vset.pattern.permute.xlu0 0
    %239 = vperm.xlu0 %238, %v165
    %v240 = vpop.permute.xlu0 %239
    %243 = vset.pattern.permute.xlu0 0
    %244 = vperm.xlu0 %243, %v166
    %v245 = vpop.permute.xlu0 %244
    %248 = vset.pattern.permute.xlu0 0
    %249 = vperm.xlu0 %248, %v167
    %v250 = vpop.permute.xlu0 %249
    %253 = vset.pattern.permute.xlu0 0
    %254 = vperm.xlu0 %253, %v168
    %v255 = vpop.permute.xlu0 %254
    %v257 = vadd.f32 %v221, %v240
    %v258 = vadd.f32 %v222, %v240
    %v259 = vadd.f32 %v223, %v245
    %v260 = vadd.f32 %v224, %v245
    %v261 = vadd.f32 %v225, %v250
    %v262 = vadd.f32 %v226, %v250
    %v263 = vadd.f32 %v227, %v255
    %v264 = vadd.f32 %v228, %v255
    %v265 = vadd.f32 %v229, %v240
    %v266 = vadd.f32 %v230, %v240
    %v267 = vadd.f32 %v231, %v245
    %v268 = vadd.f32 %v232, %v245
    %v269 = vadd.f32 %v233, %v250
    %v270 = vadd.f32 %v234, %v250
    %v271 = vadd.f32 %v235, %v255
    %v272 = vadd.f32 %v236, %v255
    %273 = vst [vmem:[#allocation5] sm:$0xff] %v257
    %274 = vst [vmem:[#allocation5 + $0x8] sm:$0xff] %v258
    %275 = vst [vmem:[#allocation5 + $0x10] sm:$0xff] %v259
    %276 = vst [vmem:[#allocation5 + $0x18] sm:$0xff] %v260
    %277 = vst [vmem:[#allocation5 + $0x20] sm:$0xff] %v261
    %278 = vst [vmem:[#allocation5 + $0x28] sm:$0xff] %v262
    %279 = vst [vmem:[#allocation5 + $0x30] sm:$0xff] %v263
    %280 = vst [vmem:[#allocation5 + $0x38] sm:$0xff] %v264
    %281 = vst [vmem:[#allocation5 + $0x40] sm:$0xff] %v265
    %282 = vst [vmem:[#allocation5 + $0x48] sm:$0xff] %v266
    %283 = vst [vmem:[#allocation5 + $0x50] sm:$0xff] %v267
    %284 = vst [vmem:[#allocation5 + $0x58] sm:$0xff] %v268
    %285 = vst [vmem:[#allocation5 + $0x60] sm:$0xff] %v269
    %286 = vst [vmem:[#allocation5 + $0x68] sm:$0xff] %v270
    %287 = vst [vmem:[#allocation5 + $0x70] sm:$0xff] %v271
    %288 = vst [vmem:[#allocation5 + $0x78] sm:$0xff] %v272
    // Predicated region
    $region18: #{tpu_custom_call.1} parent=1 // pred_check
      _
    $region19: #{tpu_custom_call.1} parent=1 // pred_check_branch
      %290 = sbr.rel (0) target = $region21
    $region20: #{tpu_custom_call.1} parent=1 // pred_region
      %s292 = ssub.s32 2048, 2048
      %293 = vsyncadd [#allocation4], %s292
      %s294 = sshll.u32 [#allocation5], 4
      %s295 = int_to_ptr.vmem [resolvable:$true] %s294
      %300 = dma.vmem_to_hbm [thread:$0]  %s295, 2048, %s3, [#allocation4], 256, 256, 16
    $region21: #{tpu_custom_call.1} parent=1 // pred_fallthru
      _
    // Predicated region
    $region22: #{tpu_custom_call.1} parent=1 // pred_check
      _
    $region23: #{tpu_custom_call.1} parent=1 // pred_check_branch
      %302 = sbr.rel (0) target = $region25
    $region24: #{tpu_custom_call.1} parent=1 // pred_region
      %303 = dma.done [#allocation4], 2048
    $region25: #{tpu_custom_call.1} parent=1 // pred_fallthru
      _
    %304 = vsyncpa [#allocation3], 1
    %305 = vsyncpa [#allocation4], 1

</llo_original>
